<compile_context>
chip_gen: v7x
topology: tpu7x:2x2x1
jax: 0.10.0
libtpu: 0.0.40
codegen_flags: <defaults>
</compile_context>

<pallas_src>
import functools

import jax
import jax.numpy as jnp
from jax.experimental import pallas as pl
from jax.experimental.pallas import tpu as pltpu

BETA = 25.0  # fixed in the module's __init__

# ~4 MiB of f32-equivalent working set per grid step: big enough to amortize
# the ~0.35 us per-step pipeline overhead, small enough (with double-buffered
# inputs + in-kernel f32 temps) to fit comfortably inside v7x's 64 MiB/TC VMEM.
_MAX_TILE_ELEMS = 1 << 20


def _choose_row_tile(n, hw, itemsize):
    """Largest aligned row tile that fits the VMEM budget (>=2 grid steps if possible)."""
    row_align = max(8, 32 // itemsize)  # 8 for f32, 16 for bf16, 32 for 8-bit
    tr = max(row_align, (_MAX_TILE_ELEMS // max(1, hw)) // row_align * row_align)
    # keep at least 2 grid steps where the problem allows it (v7x has 2 TCs)
    half = (n // 2) // row_align * row_align
    if half >= row_align:
        tr = min(tr, half)
    # never bigger than the (padded) problem itself
    n_pad_min = ((n + row_align - 1) // row_align) * row_align
    tr = min(tr, n_pad_min)
    return tr


def _ssam_kernel(x_ref, o_ref, *, h, w, normalize):
    # x_ref: (TR, HW) feature-map rows (native dtype), o_ref: (TR, 2) f32
    hw = h * w
    x = x_ref[...].astype(jnp.float32) * BETA

    # numerically-stable softmax statistics; p = e/denom is never materialized
    m = jnp.max(x, axis=-1, keepdims=True)
    e = jnp.exp(x - m)

    # Coordinate grids generated in-kernel (no extra HBM streams / VMEM bufs).
    # Flattened row-major spatial index: row = idx // w, col = idx % w,
    # computed exactly in f32 (hw << 2^24; the +0.5 guards the floor against
    # rounding of the 1/w multiply).
    idx = jax.lax.broadcasted_iota(jnp.int32, (1, hw), 1).astype(jnp.float32)
    row = jnp.floor((idx + 0.5) * (1.0 / w))
    col = idx - row * w
    if normalize:
        xs = 2.0 / (w - 1) if w > 1 else 0.0
        ys = 2.0 / (h - 1) if h > 1 else 0.0
        xc = col * xs - 1.0   # matches torch.linspace(-1, 1, w)
        yc = row * ys - 1.0   # matches torch.linspace(-1, 1, h)
    else:
        xc = col              # matches torch.arange(0, w)
        yc = row              # matches torch.arange(0, h)

    denom = jnp.sum(e, axis=-1, keepdims=True)        # (TR, 1)
    sx = jnp.sum(e * xc, axis=-1, keepdims=True)      # (TR, 1)
    sy = jnp.sum(e * yc, axis=-1, keepdims=True)      # (TR, 1)
    inv = pl.reciprocal(denom, approx=False)          # exact, (TR, 1) only

    # direct column stores (no concatenate / relayout)
    o_ref[:, 0:1] = (sx * inv).astype(o_ref.dtype)
    o_ref[:, 1:2] = (sy * inv).astype(o_ref.dtype)


def spatial_soft_argmax(x, normalize=True):
    """x: (B, C, H, W) float array. Returns (B, C, 2) f32: [x_mean, y_mean]."""
    b, c, h, w = x.shape
    hw = h * w
    n = b * c

    # keep the native dtype on the HBM wire; cast to f32 inside the kernel
    x2d = x.reshape(n, hw)
    itemsize = jnp.dtype(x2d.dtype).itemsize

    tr = _choose_row_tile(n, hw, itemsize)
    n_pad = pl.cdiv(n, tr) * tr
    if n_pad != n:
        # pad rows instead of shrinking the tile below the (8,128) alignment
        x2d = jnp.pad(x2d, ((0, n_pad - n), (0, 0)))
    grid = (n_pad // tr,)

    out2d = pl.pallas_call(
        functools.partial(_ssam_kernel, h=h, w=w, normalize=normalize),
        out_shape=jax.ShapeDtypeStruct((n_pad, 2), jnp.float32),
        grid_spec=pltpu.PrefetchScalarGridSpec(
            num_scalar_prefetch=0,
            grid=grid,
            in_specs=[pl.BlockSpec((tr, hw), lambda i: (i, 0))],
            out_specs=pl.BlockSpec((tr, 2), lambda i: (i, 0)),
        ),
        compiler_params=pltpu.CompilerParams(
            dimension_semantics=("parallel",),
            vmem_limit_bytes=48 * 1024 * 1024,
        ),
    )(x2d)

    return out2d[:n].reshape(b, c, 2)


def _reference(x, normalize=True):
    """Pure-JAX reference mirroring the PyTorch forward (f32 math)."""
    b, c, h, w = x.shape
    hw = h * w
    xf = x.astype(jnp.float32)
    sm = jax.nn.softmax(xf.reshape(-1, hw) * BETA, axis=-1)
    if normalize:
        y_lin = jnp.linspace(-1.0, 1.0, h, dtype=jnp.float32)
        x_lin = jnp.linspace(-1.0, 1.0, w, dtype=jnp.float32)
    else:
        y_lin = jnp.arange(0, h, dtype=jnp.float32)
        x_lin = jnp.arange(0, w, dtype=jnp.float32)
    yc = jnp.repeat(y_lin, w)
    xc = jnp.tile(x_lin, h)
    x_mean = jnp.sum(sm * xc, axis=1, keepdims=True)
    y_mean = jnp.sum(sm * yc, axis=1, keepdims=True)
    return jnp.concatenate([x_mean, y_mean], axis=1).reshape(b, c, 2)


if __name__ == "__main__":
    key = jax.random.PRNGKey(0)
    k1, k2 = jax.random.split(key)

    # Case 1: f32 input, normalized coords (B*C = 8 -> single 8-row tile).
    B, C, H, W = 2, 4, 16, 16
    x = jax.random.normal(k1, (B, C, H, W), dtype=jnp.float32)
    out = jax.block_until_ready(spatial_soft_argmax(x, normalize=True))
    ref = _reference(x, normalize=True)
    assert out.shape == (B, C, 2), out.shape
    assert jnp.allclose(out, ref, atol=1e-5, rtol=1e-5), (
        "mismatch vs reference", float(jnp.max(jnp.abs(out - ref))))

    # Case 2: bf16 on the HBM wire, pixel coords, B*C = 6 -> padded to a
    # 16-row (bf16-aligned) tile.  Reference uses the same bf16-rounded input.
    B2, C2, H2, W2 = 2, 3, 12, 20
    x2 = jax.random.normal(k2, (B2, C2, H2, W2), dtype=jnp.float32).astype(jnp.bfloat16)
    out2 = jax.block_until_ready(spatial_soft_argmax(x2, normalize=False))
    ref2 = _reference(x2, normalize=False)
    assert out2.shape == (B2, C2, 2), out2.shape
    assert jnp.allclose(out2, ref2, atol=1e-3, rtol=1e-3), (
        "mismatch vs reference (bf16)", float(jnp.max(jnp.abs(out2 - ref2))))

    print("KERNEL_OK")
</pallas_src>

<mosaic_0001>
module attributes {stable_mosaic.version = 11 : i64} {
  func.func @_ssam_kernel(%arg0: i32, %arg1: memref<8x256xf32, #tpu.memory_space<vmem>>, %arg2: memref<8x2xf32, #tpu.memory_space<vmem>>) attributes {dimension_semantics = [#tpu.dimension_semantics<parallel>], iteration_bounds = array<i64: 1>, scalar_prefetch = 0 : i64, scratch_operands = 0 : i64, tpu.core_type = #tpu.core_type<tc>, window_params = [{transform_indices = @transform_0, window_bounds = array<i64: 8, 256>}, {transform_indices = @transform_1, window_bounds = array<i64: 8, 2>}]} {
    %c0 = arith.constant 0 : index
    %c0_0 = arith.constant 0 : index
    %0 = vector.load %arg1[%c0, %c0_0] : memref<8x256xf32, #tpu.memory_space<vmem>>, vector<8x256xf32>
    %cst = arith.constant 2.500000e+01 : f32
    %1 = vector.broadcast %cst : f32 to vector<8x256xf32>
    %2 = arith.mulf %0, %1 : vector<8x256xf32>
    %cst_1 = arith.constant dense<0xFF800000> : vector<8xf32>
    %3 = vector.multi_reduction <maximumf>, %2, %cst_1 [1] : vector<8x256xf32> to vector<8xf32>
    %4 = vector.shape_cast %3 : vector<8xf32> to vector<8x1xf32>
    %5 = vector.broadcast %4 : vector<8x1xf32> to vector<8x256xf32>
    %6 = arith.subf %2, %5 : vector<8x256xf32>
    %7 = math.exp %6 : vector<8x256xf32>
    %8 = tpu.iota {dimensions = array<i32: 1>} : vector<1x256xi32>
    %9 = arith.sitofp %8 : vector<1x256xi32> to vector<1x256xf32>
    %cst_2 = arith.constant 5.000000e-01 : f32
    %10 = vector.broadcast %cst_2 : f32 to vector<1x256xf32>
    %11 = arith.addf %9, %10 : vector<1x256xf32>
    %cst_3 = arith.constant 6.250000e-02 : f32
    %12 = vector.broadcast %cst_3 : f32 to vector<1x256xf32>
    %13 = arith.mulf %11, %12 : vector<1x256xf32>
    %14 = math.floor %13 : vector<1x256xf32>
    %cst_4 = arith.constant 1.600000e+01 : f32
    %15 = vector.broadcast %cst_4 : f32 to vector<1x256xf32>
    %16 = arith.mulf %14, %15 : vector<1x256xf32>
    %17 = arith.subf %9, %16 : vector<1x256xf32>
    %cst_5 = arith.constant 0.13333334 : f32
    %18 = vector.broadcast %cst_5 : f32 to vector<1x256xf32>
    %19 = arith.mulf %17, %18 : vector<1x256xf32>
    %cst_6 = arith.constant 1.000000e+00 : f32
    %20 = vector.broadcast %cst_6 : f32 to vector<1x256xf32>
    %21 = arith.subf %19, %20 : vector<1x256xf32>
    %cst_7 = arith.constant 0.13333334 : f32
    %22 = vector.broadcast %cst_7 : f32 to vector<1x256xf32>
    %23 = arith.mulf %14, %22 : vector<1x256xf32>
    %cst_8 = arith.constant 1.000000e+00 : f32
    %24 = vector.broadcast %cst_8 : f32 to vector<1x256xf32>
    %25 = arith.subf %23, %24 : vector<1x256xf32>
    %cst_9 = arith.constant dense<0.000000e+00> : vector<8xf32>
    %26 = vector.multi_reduction <add>, %7, %cst_9 [1] : vector<8x256xf32> to vector<8xf32>
    %27 = vector.shape_cast %26 : vector<8xf32> to vector<8x1xf32>
    %28 = vector.broadcast %21 : vector<1x256xf32> to vector<8x256xf32>
    %29 = arith.mulf %7, %28 : vector<8x256xf32>
    %cst_10 = arith.constant dense<0.000000e+00> : vector<8xf32>
    %30 = vector.multi_reduction <add>, %29, %cst_10 [1] : vector<8x256xf32> to vector<8xf32>
    %31 = vector.shape_cast %30 : vector<8xf32> to vector<8x1xf32>
    %32 = vector.broadcast %25 : vector<1x256xf32> to vector<8x256xf32>
    %33 = arith.mulf %7, %32 : vector<8x256xf32>
    %cst_11 = arith.constant dense<0.000000e+00> : vector<8xf32>
    %34 = vector.multi_reduction <add>, %33, %cst_11 [1] : vector<8x256xf32> to vector<8xf32>
    %35 = vector.shape_cast %34 : vector<8xf32> to vector<8x1xf32>
    %36 = tpu.reciprocal %27 : vector<8x1xf32> -> vector<8x1xf32>
    %37 = arith.mulf %31, %36 : vector<8x1xf32>
    %c0_12 = arith.constant 0 : index
    %c0_13 = arith.constant 0 : index
    %38 = vector.load %arg2[%c0_12, %c0_13] : memref<8x2xf32, #tpu.memory_space<vmem>>, vector<8x1xf32>
    tpu.vector_store %arg2[%c0_12, %c0_13], %37 {strides = array<i32>} : memref<8x2xf32, #tpu.memory_space<vmem>>, vector<8x1xf32>,
    %39 = arith.mulf %35, %36 : vector<8x1xf32>
    %c0_14 = arith.constant 0 : index
    %c1 = arith.constant 1 : index
    %40 = vector.load %arg2[%c0_14, %c1] : memref<8x2xf32, #tpu.memory_space<vmem>>, vector<8x1xf32>
    tpu.vector_store %arg2[%c0_14, %c1], %39 {strides = array<i32>} : memref<8x2xf32, #tpu.memory_space<vmem>>, vector<8x1xf32>,
    return
  }
  func.func @transform_0(%arg0: i32) -> (i32, i32) {
    %c0_i32 = arith.constant 0 : i32
    %c0_i32_0 = arith.constant 0 : i32
    return %arg0, %c0_i32 : i32, i32
  }
  func.func @transform_1(%arg0: i32) -> (i32, i32) {
    %c0_i32 = arith.constant 0 : i32
    %c0_i32_0 = arith.constant 0 : i32
    return %arg0, %c0_i32 : i32, i32
  }
}

</mosaic_0001>

<llo_original>
// kernel: tpu_custom_call.1
$region0: #{tpu_custom_call.1}
  #allocation0 [shape = 'u32[]', space=smem, size = 0x4, offset = 0x4, fixed_abs, tag = 'smem constant byte address 0x4 - core index']
  #allocation1 [shape = 'u32[144,128]{1,0:T(1,128)}', space=vmem, size = 0x12000, scoped, tag = 'internal scratch']
  %s0 = inlined_call_operand.hbm [shape: f32[8,256], index: 0, kind: input, shape index: {}]
  %s1 = inlined_call_operand.vmem [shape: f32[8,2], index: 1, kind: output, shape index: {}]
  %s2 = sld [smem:[#allocation0]]
  $region18: #{tpu_custom_call.1} parent=0
    _
  %s4 = ssub.s32 1, %s2
  %s5 = scalar_select 0, %s4, %s2
  $region1: #{tpu_custom_call.1} parent=0
    #allocation2 [shape = 'u8[8192]{0}', space=vmem, size = 0x2000, scoped, tag = 'input window, operand 0, single buffered']
    #allocation3 [shape = 's32[1]{0}', space=sflag, size = 0x4, scoped, tag = 'scoped memory for tpu_custom_call.1']
    %6 = vsyncpa [#allocation3], 0
    // Predicated region
    $region2: #{tpu_custom_call.1} parent=1 // pred_check
      _
    $region3: #{tpu_custom_call.1} parent=1 // pred_check_branch
      %8 = sbr.rel (0) target = $region5
    $region4: #{tpu_custom_call.1} parent=1 // pred_region
      %s10 = ssub.s32 256, 256
      %11 = vsyncadd [#allocation3], %s10
      %s13 = sshll.u32 [#allocation2], 4
      %s14 = int_to_ptr.vmem [resolvable:$true] %s13
      %16 = dma.hbm_to_vmem [thread:$0]  %s0, 256, %s14, [#allocation3]
    $region5: #{tpu_custom_call.1} parent=1 // pred_fallthru
      _
    // Predicated region
    $region6: #{tpu_custom_call.1} parent=1 // pred_check
      _
    $region7: #{tpu_custom_call.1} parent=1 // pred_check_branch
      %18 = sbr.rel (0) target = $region9
    $region8: #{tpu_custom_call.1} parent=1 // pred_region
      %19 = dma.done [#allocation3], 256
    $region9: #{tpu_custom_call.1} parent=1 // pred_fallthru
      _
    %v20 = vld [vmem:[#allocation2] sm:$0xff]
    %v21 = vld [vmem:[#allocation2 + $0x8] sm:$0xff]
    %v22 = vmul.f32 %v20, 25.0
    %v23 = vmul.f32 %v21, 25.0
    %v24 = vmax.f32 %v22, %v23
    %25 = vmax.xlane.f32.xlu0 %v24
    %v26 = vpop.xlane.xlu0 %25
    %v27 = vsub.f32 %v22, %v26
    %v28 = vsub.f32 %v23, %v26
    %v29 = vmul.f32 %v27, 1.442695
    %v30 = vpow.pop %v29
    %v31 = vmul.f32 %v28, 1.442695
    %v32 = vpow.pop %v31
    %v33 = vlaneseq
    %v34 = vand.u32 %v33, 127
    %v35 = vadd.s32 %v34, 128
    %v36 = vcvt.s32.f32 %v34
    %v37 = vcvt.s32.f32 %v35
    %v38 = vadd.f32 %v36, 0.5
    %v39 = vadd.f32 %v37, 0.5
    %v40 = vmul.f32 %v38, 0.0625
    %v41 = vmul.f32 %v39, 0.0625
    %v42 = vfloor.f32 %v40
    %v43 = vfloor.f32 %v41
    %v44 = vmul.f32 %v42, 16.0
    %v45 = vmul.f32 %v43, 16.0
    %v46 = vsub.f32 %v36, %v44
    %v47 = vsub.f32 %v37, %v45
    %v48 = vmul.f32 %v46, 0.13333334
    %v49 = vmul.f32 %v47, 0.13333334
    %v50 = vsub.f32 %v48, 1.0
    %v51 = vsub.f32 %v49, 1.0
    %v52 = vmul.f32 %v42, 0.13333334
    %v53 = vmul.f32 %v43, 0.13333334
    %v54 = vsub.f32 %v52, 1.0
    %v55 = vsub.f32 %v53, 1.0
    %v56 = vadd.f32 %v30, %v32
    %57 = vadd.xlane.f32.xlu0 %v56
    %v58 = vpop.xlane.xlu0 %57
    %v59 = vmul.f32 %v30, %v50
    %v60 = vmul.f32 %v32, %v51
    %v61 = vadd.f32 %v59, %v60
    %62 = vadd.xlane.f32.xlu0 %v61
    %v63 = vpop.xlane.xlu0 %62
    %v64 = vmul.f32 %v30, %v54
    %v65 = vmul.f32 %v32, %v55
    %v66 = vadd.f32 %v64, %v65
    %67 = vadd.xlane.f32.xlu0 %v66
    %v68 = vpop.xlane.xlu0 %67
    %v69 = vrcp.pop %v58
    %v70 = vmul.f32 %v63, %v69
    %vm71 = vcmask 7168
    %72 = vst.msk [vmem:[%s1] sm:$0xff] %vm71, %v70
    %v73 = vmul.f32 %v68, %v69
    %vm74 = vcmask 15368
    %75 = vst.msk [vmem:[%s1] sm:$0xff] %vm74, %v73
    // Predicated region
    $region10: #{tpu_custom_call.1} parent=1 // pred_check
      _
    $region11: #{tpu_custom_call.1} parent=1 // pred_check_branch
      %77 = sbr.rel (0) target = $region13
    $region12: #{tpu_custom_call.1} parent=1 // pred_region
      _
    $region13: #{tpu_custom_call.1} parent=1 // pred_fallthru
      _
    // Predicated region
    $region14: #{tpu_custom_call.1} parent=1 // pred_check
      _
    $region15: #{tpu_custom_call.1} parent=1 // pred_check_branch
      %79 = sbr.rel (0) target = $region17
    $region16: #{tpu_custom_call.1} parent=1 // pred_region
      _
    $region17: #{tpu_custom_call.1} parent=1 // pred_fallthru
      _
    %80 = vsyncpa [#allocation3], 1

</llo_original>
